<compile_context>
chip_gen: v5e
topology: v5e:2x2
jax: 0.10.0
libtpu: 0.0.40
codegen_flags: <defaults>
</compile_context>

<pallas_src>
import jax
import jax.numpy as jnp
from jax.experimental import pallas as pl
from jax.experimental.pallas import tpu as pltpu

EPS = 1e-5  # torch.nn.LayerNorm default


def _layernorm(x, g, b):
    mu = jnp.mean(x, axis=-1, keepdims=True)
    var = jnp.mean(jnp.square(x - mu), axis=-1, keepdims=True)  # biased, like torch
    return (x - mu) * jax.lax.rsqrt(var + EPS) * g + b


# ---------------------------------------------------------------------------
# Per-generation VMEM budget & tiling helpers
# ---------------------------------------------------------------------------
def _vmem_limits():
    """(scoped vmem limit handed to Mosaic, budget used for tile sizing)."""
    try:
        cap = int(pltpu.get_tpu_info().vmem_capacity_bytes)
    except Exception:
        cap = 64 * 1024 * 1024            # conservative fallback (v7x-sized)
    limit = min(int(cap * 0.7), 100 * 1024 * 1024)
    budget = int(limit * 0.8)             # headroom for Mosaic-internal scratch
    return limit, budget


def _divisor_tiles(n, align, cap):
    """Divisors of n that are multiples of `align`, <= cap, descending."""
    cands = [d for d in range(align, min(n, cap) + 1, align) if n % d == 0]
    if not cands:
        return [n]                         # fall back to the full dimension
    return sorted(cands, reverse=True)


def _select_block_tiles(T, B, E, gx_bytes, w_bytes, budget):
    """Pick (tb, tT): maximize tb first (MXU rows in the serial recurrence)."""
    # Invariant weights: ~16*E^2 elems; budget as double-buffered.
    # TODO(synk): single-buffer the grid-invariant weight blocks (pl.Buffered(1))
    # to reclaim half of this once that pipeline_mode path is exercised.
    weights = 2 * 16 * E * E * w_bytes + 2 * 16 * E * 4
    avail = max(budget - weights, 1)

    def est(tb, tT):
        act_io = 2 * 2 * (tT * tb * E * 4)      # double-buffered in/out tiles (f32)
        gx = tT * tb * 4 * E * gx_bytes         # gate-projection scratch
        tmp = tT * tb * 4 * E * 4               # f32 temporaries (gate proj / FFN hidden)
        state = 2 * tb * E * 4                  # h, c carries
        return act_io + gx + tmp + state

    tb_c = _divisor_tiles(B, 8, 256)
    tT_c = _divisor_tiles(T, 1, 64)
    for tb in tb_c:
        for tT in tT_c:
            if est(tb, tT) <= avail:
                return tb, tT
    return tb_c[-1], tT_c[-1]


def _select_head_tiles(T, B, E, Vp, w_bytes, budget):
    """Pick (tq, tv): maximize rows first (cuts lm_head weight re-streaming)."""
    def est(tq, tv):
        x_in = 2 * tq * B * E * 4
        w_in = 2 * (E * tv * w_bytes + tv * 4)
        out = 2 * B * tq * tv * 4
        xn = B * tq * E * w_bytes
        tmp = B * tq * tv * 4
        return x_in + w_in + out + xn + tmp

    tq_c = _divisor_tiles(T, 8, 2048)
    tv_c = _divisor_tiles(Vp, 128, 4096)
    for tq in tq_c:
        for tv in tv_c:
            if est(tq, tv) <= budget:
                return tq, tv
    return tq_c[-1], tv_c[-1]


# ---------------------------------------------------------------------------
# Pallas kernels
# ---------------------------------------------------------------------------
def lstm_block_kernel(x_ref, ln1g_ref, ln1b_ref,
                      wih_t_ref, whh_t_ref, blstm_ref,
                      ln2g_ref, ln2b_ref,
                      w1_t_ref, b1_ref, w2_t_ref, b2_ref,
                      out_ref, gx_ref, h_ref, c_ref):
    """One LSTMBlock on a (tT, tb, E) time-major tile.

    Grid = (batch tiles [parallel], time chunks [arbitrary]); (h, c) persist in
    VMEM scratch across time chunks of the same batch tile.
    """
    tT, tb, E = x_ref.shape

    @pl.when(pl.program_id(1) == 0)                 # first time chunk: reset state
    def _():
        h_ref[...] = jnp.zeros_like(h_ref)
        c_ref[...] = jnp.zeros_like(c_ref)

    xn = _layernorm(x_ref[...], ln1g_ref[...], ln1b_ref[...])

    # Hoisted input projection: one large matmul feeding the whole chunk's recurrence.
    w_ih = wih_t_ref[...]
    gx = (jnp.dot(xn.reshape(tT * tb, E).astype(w_ih.dtype), w_ih,
                  preferred_element_type=jnp.float32)
          + blstm_ref[...])                          # bias folded in once
    gx_ref[...] = gx.reshape(tT, tb, 4 * E).astype(gx_ref.dtype)

    w_hh = whh_t_ref[...]                            # invariant load hoisted out of the loop

    def step(t, _):
        h = h_ref[...]
        c = c_ref[...]
        gates = gx_ref[t].astype(jnp.float32) + jnp.dot(
            h.astype(w_hh.dtype), w_hh, preferred_element_type=jnp.float32)
        # torch gate order: i, f, g, o
        # TODO(synk): on v6e/v7x the gate nonlinearities + c/h updates could run in
        # bf16 (bf16 VPU/EUP) for ~2x on the recurrence tail; kept f32 for accuracy.
        i = jax.nn.sigmoid(gates[:, 0:E])
        f = jax.nn.sigmoid(gates[:, E:2 * E])
        g = jnp.tanh(gates[:, 2 * E:3 * E])
        o = jax.nn.sigmoid(gates[:, 3 * E:4 * E])
        c_new = f * c + i * g
        h_new = o * jnp.tanh(c_new)
        h_ref[...] = h_new
        c_ref[...] = c_new
        out_ref[t] = h_new                           # store h; residual added after the loop
        return 0

    jax.lax.fori_loop(0, tT, step, 0)

    # First residual (lstm_dropout is identity in eval).
    y = x_ref[...] + out_ref[...]

    # FFN: Linear(E, 4E) -> ReLU -> Linear(4E, E) as two big (tT*tb, .) matmuls.
    yn = _layernorm(y, ln2g_ref[...], ln2b_ref[...])
    w1 = w1_t_ref[...]
    w2 = w2_t_ref[...]
    h1 = jnp.maximum(
        jnp.dot(yn.reshape(tT * tb, E).astype(w1.dtype), w1,
                preferred_element_type=jnp.float32) + b1_ref[...], 0.0)
    ff = (jnp.dot(h1.astype(w2.dtype), w2,
                  preferred_element_type=jnp.float32)
          + b2_ref[...]).reshape(tT, tb, E)
    out_ref[...] = y + ff                            # second residual (ffn dropout = identity)


def head_kernel(x_ref, lng_ref, lnb_ref, w_ref, b_ref, out_ref, xn_ref):
    """Final LayerNorm + lm_head on a (tq, B, E) time-major tile.

    LayerNorm is computed once per row tile (j == 0) and cached in VMEM scratch,
    already reordered batch-major so the output block is (B, tq, tv) -- this folds
    the (T,B)->(B,T) permutation into the head instead of a standalone transpose.
    """
    B, tq, E = xn_ref.shape

    @pl.when(pl.program_id(1) == 0)
    def _():
        xn = _layernorm(x_ref[...], lng_ref[...], lnb_ref[...])     # (tq, B, E) f32
        for b in range(B):                                          # batch-major reorder
            xn_ref[b] = xn[:, b, :].astype(xn_ref.dtype)

    w = w_ref[...]                                                  # (E, tv)
    acc = jnp.dot(xn_ref[...].reshape(B * tq, E), w,
                  preferred_element_type=jnp.float32) + b_ref[...]
    out_ref[...] = acc.reshape(out_ref.shape)


# ---------------------------------------------------------------------------
# Wrappers around pallas_call
# ---------------------------------------------------------------------------
def run_block(x_tbe, p, vmem_limit, vmem_budget):
    T, B, E = x_tbe.shape
    wdt = p["w_ih_t"].dtype
    wbytes = jnp.dtype(wdt).itemsize
    tb, tT = _select_block_tiles(T, B, E, wbytes, wbytes, vmem_budget)
    grid = (B // tb, T // tT)                        # time chunks innermost (state carry)

    def act_map(b, t):
        return (t, b, 0)

    def w_map(b, t):
        return (0, 0)

    weight_names = ("ln1_g", "ln1_b", "w_ih_t", "w_hh_t", "b_lstm",
                    "ln2_g", "ln2_b", "w1_t", "b1", "w2_t", "b2")
    w_specs = [pl.BlockSpec(p[name].shape, w_map) for name in weight_names]

    cost = pl.CostEstimate(
        flops=32 * T * B * E * E,                    # 4 matmuls of ~8*T*B*E^2 each
        transcendentals=5 * T * B * E,               # 3 sigmoid + 2 tanh per (t, b, e)
        bytes_accessed=2 * 4 * T * B * E + wbytes * 16 * E * E,
    )

    return pl.pallas_call(
        lstm_block_kernel,
        out_shape=jax.ShapeDtypeStruct((T, B, E), jnp.float32),
        grid_spec=pltpu.PrefetchScalarGridSpec(
            num_scalar_prefetch=0,
            grid=grid,
            in_specs=[pl.BlockSpec((tT, tb, E), act_map)] + w_specs,
            out_specs=pl.BlockSpec((tT, tb, E), act_map),
            scratch_shapes=[
                pltpu.VMEM((tT, tb, 4 * E), wdt),        # gate projection (matmul dtype)
                pltpu.VMEM((tb, E), jnp.float32),        # h carry (persists across chunks)
                pltpu.VMEM((tb, E), jnp.float32),        # c carry
            ],
        ),
        compiler_params=pltpu.CompilerParams(
            dimension_semantics=("parallel", "arbitrary"),
            vmem_limit_bytes=vmem_limit,
        ),
        cost_estimate=cost,
    )(x_tbe, *(p[name] for name in weight_names))


def run_head(x_tbe, params, vmem_limit, vmem_budget):
    T, B, E = x_tbe.shape
    wh = params["wh_t"]
    bh = params["bh"]
    V = wh.shape[1]
    wbytes = jnp.dtype(wh.dtype).itemsize
    Vp = ((V + 127) // 128) * 128
    if Vp != V:
        # TODO(synk): pad once at init time instead of per forward call.
        wh = jnp.pad(wh, ((0, 0), (0, Vp - V)))
        bh = jnp.pad(bh, ((0, 0), (0, Vp - V)))
    tq, tv = _select_head_tiles(T, B, E, Vp, wbytes, vmem_budget)
    grid = (T // tq, Vp // tv)

    cost = pl.CostEstimate(
        flops=2 * B * T * E * Vp,
        transcendentals=0,
        bytes_accessed=4 * T * B * E + wbytes * E * Vp * (T // tq) + 4 * B * T * Vp,
    )

    out = pl.pallas_call(
        head_kernel,
        out_shape=jax.ShapeDtypeStruct((B, T, Vp), jnp.float32),
        grid_spec=pltpu.PrefetchScalarGridSpec(
            num_scalar_prefetch=0,
            grid=grid,
            in_specs=[
                pl.BlockSpec((tq, B, E), lambda i, j: (i, 0, 0)),
                pl.BlockSpec((1, E), lambda i, j: (0, 0)),
                pl.BlockSpec((1, E), lambda i, j: (0, 0)),
                pl.BlockSpec((E, tv), lambda i, j: (0, j)),
                pl.BlockSpec((1, tv), lambda i, j: (0, j)),
            ],
            out_specs=pl.BlockSpec((B, tq, tv), lambda i, j: (0, i, j)),
            scratch_shapes=[pltpu.VMEM((B, tq, E), wh.dtype)],   # cached LN output
        ),
        compiler_params=pltpu.CompilerParams(
            dimension_semantics=("parallel", "arbitrary"),
            vmem_limit_bytes=vmem_limit,
        ),
        cost_estimate=cost,
    )(x_tbe, params["lnf_g"], params["lnf_b"], wh, bh)
    return out[:, :, :V] if Vp != V else out


def lstm_language_model(idx, params):
    """Forward pass. idx: (B, T) int32. Returns (logits (B, T, V), None)."""
    vmem_limit, vmem_budget = _vmem_limits()
    x = params["embed"][idx.T]                       # (T, B, E), gathered time-major
    for p in params["blocks"]:
        x = run_block(x, p, vmem_limit, vmem_budget)
    logits = run_head(x, params, vmem_limit, vmem_budget)   # (B, T, V); permutation folded in
    # TODO(synk): cross-entropy loss path (targets is not None) not implemented.
    return logits, None


# ---------------------------------------------------------------------------
# Deterministic parameter init (mirrors module shapes / _init_weights)
# ---------------------------------------------------------------------------
def init_params(key, vocab_size, embed_size, layer_num, matmul_dtype=jnp.bfloat16):
    E = embed_size
    keys = jax.random.split(key, 2 + layer_num)
    params = {"embed": 0.02 * jax.random.normal(keys[0], (vocab_size, E), jnp.float32)}
    k = 1.0 / float(E) ** 0.5
    blocks = []
    for l in range(layer_num):
        ks = jax.random.split(keys[1 + l], 6)
        w_ih = jax.random.uniform(ks[0], (4 * E, E), jnp.float32, -k, k)
        w_hh = jax.random.uniform(ks[1], (4 * E, E), jnp.float32, -k, k)
        b_ih = jax.random.uniform(ks[2], (4 * E,), jnp.float32, -k, k)
        b_hh = jax.random.uniform(ks[3], (4 * E,), jnp.float32, -k, k)
        w1 = 0.02 * jax.random.normal(ks[4], (4 * E, E), jnp.float32)   # Linear(E, 4E)
        w2 = 0.02 * jax.random.normal(ks[5], (E, 4 * E), jnp.float32)   # Linear(4E, E)
        blocks.append(dict(
            ln1_g=jnp.ones((1, E), jnp.float32), ln1_b=jnp.zeros((1, E), jnp.float32),
            w_ih_t=w_ih.T.astype(matmul_dtype), w_hh_t=w_hh.T.astype(matmul_dtype),
            b_lstm=(b_ih + b_hh).reshape(1, 4 * E),
            ln2_g=jnp.ones((1, E), jnp.float32), ln2_b=jnp.zeros((1, E), jnp.float32),
            w1_t=w1.T.astype(matmul_dtype), b1=jnp.zeros((1, 4 * E), jnp.float32),
            w2_t=w2.T.astype(matmul_dtype), b2=jnp.zeros((1, E), jnp.float32),
        ))
    params["blocks"] = blocks
    wh = 0.02 * jax.random.normal(keys[-1], (vocab_size, E), jnp.float32)   # lm_head
    params["lnf_g"] = jnp.ones((1, E), jnp.float32)
    params["lnf_b"] = jnp.zeros((1, E), jnp.float32)
    params["wh_t"] = wh.T.astype(matmul_dtype)
    params["bh"] = jnp.zeros((1, vocab_size), jnp.float32)
    return params


# ---------------------------------------------------------------------------
# Pure-JAX reference (mirrors the kernel's cast points exactly)
# ---------------------------------------------------------------------------
def reference_forward(idx, params):
    def mm(a, w):
        return jnp.dot(a.astype(w.dtype), w, preferred_element_type=jnp.float32)

    x = params["embed"][idx]                        # (B, T, E)
    Bsz, T, E = x.shape
    for p in params["blocks"]:
        xn = _layernorm(x, p["ln1_g"], p["ln1_b"])
        gx = (mm(xn, p["w_ih_t"]) + p["b_lstm"][0]).astype(p["w_ih_t"].dtype)
        h = jnp.zeros((Bsz, E), jnp.float32)
        c = jnp.zeros((Bsz, E), jnp.float32)
        outs = []
        for t in range(T):
            gates = gx[:, t].astype(jnp.float32) + mm(h, p["w_hh_t"])
            i = jax.nn.sigmoid(gates[:, 0:E])
            f = jax.nn.sigmoid(gates[:, E:2 * E])
            g = jnp.tanh(gates[:, 2 * E:3 * E])
            o = jax.nn.sigmoid(gates[:, 3 * E:4 * E])
            c = f * c + i * g
            h = o * jnp.tanh(c)
            outs.append(h)
        x = x + jnp.stack(outs, axis=1)
        yn = _layernorm(x, p["ln2_g"], p["ln2_b"])
        h1 = jnp.maximum(mm(yn, p["w1_t"]) + p["b1"][0], 0.0)
        x = x + (mm(h1, p["w2_t"]) + p["b2"][0])
    xn = _layernorm(x, params["lnf_g"], params["lnf_b"])
    return mm(xn, params["wh_t"]) + params["bh"][0]   # (B, T, V)


if __name__ == "__main__":
    VOCAB, EMBED, LAYERS = 64, 32, 2
    B, T = 2, 8

    key = jax.random.PRNGKey(0)
    k_params, k_idx = jax.random.split(key)
    idx = jax.random.randint(k_idx, (B, T), 0, VOCAB, dtype=jnp.int32)

    # Strict semantic check: f32 matmul weights (exact PyTorch math).
    params_f32 = init_params(k_params, VOCAB, EMBED, LAYERS, matmul_dtype=jnp.float32)
    logits32, loss = lstm_language_model(idx, params_f32)
    logits32 = jax.block_until_ready(logits32)
    ref32 = jax.block_until_ready(reference_forward(idx, params_f32))
    assert logits32.shape == (B, T, VOCAB) and loss is None
    assert jnp.max(jnp.abs(logits32 - ref32)) < 1e-4, "f32 Pallas output mismatch"

    # Default path: bf16 matmul weights (MXU-rate); reference mirrors the casts.
    params_bf16 = init_params(k_params, VOCAB, EMBED, LAYERS)
    logits16, _ = lstm_language_model(idx, params_bf16)
    logits16 = jax.block_until_ready(logits16)
    ref16 = jax.block_until_ready(reference_forward(idx, params_bf16))
    assert logits16.shape == (B, T, VOCAB)
    assert jnp.max(jnp.abs(logits16 - ref16)) < 2e-2, "bf16 Pallas output mismatch"

    print("KERNEL_OK")
</pallas_src>

<mosaic_0001>
module attributes {stable_mosaic.version = 11 : i64} {
  func.func @lstm_block_kernel(%arg0: i32, %arg1: i32, %arg2: memref<8x2x32xf32, #tpu.memory_space<vmem>>, %arg3: memref<1x32xf32, #tpu.memory_space<vmem>>, %arg4: memref<1x32xf32, #tpu.memory_space<vmem>>, %arg5: memref<32x128xf32, #tpu.memory_space<vmem>>, %arg6: memref<32x128xf32, #tpu.memory_space<vmem>>, %arg7: memref<1x128xf32, #tpu.memory_space<vmem>>, %arg8: memref<1x32xf32, #tpu.memory_space<vmem>>, %arg9: memref<1x32xf32, #tpu.memory_space<vmem>>, %arg10: memref<32x128xf32, #tpu.memory_space<vmem>>, %arg11: memref<1x128xf32, #tpu.memory_space<vmem>>, %arg12: memref<128x32xf32, #tpu.memory_space<vmem>>, %arg13: memref<1x32xf32, #tpu.memory_space<vmem>>, %arg14: memref<8x2x32xf32, #tpu.memory_space<vmem>>, %arg15: memref<8x2x128xf32, #tpu.memory_space<vmem>>, %arg16: memref<2x32xf32, #tpu.memory_space<vmem>>, %arg17: memref<2x32xf32, #tpu.memory_space<vmem>>) attributes {dimension_semantics = [#tpu.dimension_semantics<parallel>, #tpu.dimension_semantics<arbitrary>], iteration_bounds = array<i64: 1, 1>, scalar_prefetch = 0 : i64, scratch_operands = 3 : i64, tpu.core_type = #tpu.core_type<tc>, window_params = [{transform_indices = @transform_0, window_bounds = array<i64: 8, 2, 32>}, {pipeline_mode = #tpu.pipeline_mode<synchronous>, transform_indices = @transform_1, window_bounds = array<i64: 1, 32>}, {pipeline_mode = #tpu.pipeline_mode<synchronous>, transform_indices = @transform_2, window_bounds = array<i64: 1, 32>}, {pipeline_mode = #tpu.pipeline_mode<synchronous>, transform_indices = @transform_3, window_bounds = array<i64: 32, 128>}, {pipeline_mode = #tpu.pipeline_mode<synchronous>, transform_indices = @transform_4, window_bounds = array<i64: 32, 128>}, {pipeline_mode = #tpu.pipeline_mode<synchronous>, transform_indices = @transform_5, window_bounds = array<i64: 1, 128>}, {pipeline_mode = #tpu.pipeline_mode<synchronous>, transform_indices = @transform_6, window_bounds = array<i64: 1, 32>}, {pipeline_mode = #tpu.pipeline_mode<synchronous>, transform_indices = @transform_7, window_bounds = array<i64: 1, 32>}, {pipeline_mode = #tpu.pipeline_mode<synchronous>, transform_indices = @transform_8, window_bounds = array<i64: 32, 128>}, {pipeline_mode = #tpu.pipeline_mode<synchronous>, transform_indices = @transform_9, window_bounds = array<i64: 1, 128>}, {pipeline_mode = #tpu.pipeline_mode<synchronous>, transform_indices = @transform_10, window_bounds = array<i64: 128, 32>}, {pipeline_mode = #tpu.pipeline_mode<synchronous>, transform_indices = @transform_11, window_bounds = array<i64: 1, 32>}, {transform_indices = @transform_12, window_bounds = array<i64: 8, 2, 32>}]} {
    %c0_i32 = arith.constant 0 : i32
    %0 = arith.cmpi eq, %arg1, %c0_i32 : i32
    %1 = arith.extui %0 : i1 to i32
    %c0_i32_0 = arith.constant 0 : i32
    %2 = arith.cmpi ne, %1, %c0_i32_0 : i32
    scf.if %2 {
      %cst_52 = arith.constant 0.000000e+00 : f32
      %85 = vector.broadcast %cst_52 : f32 to vector<2x32xf32>
      %c0_53 = arith.constant 0 : index
      %c0_54 = arith.constant 0 : index
      %86 = vector.load %arg16[%c0_53, %c0_54] : memref<2x32xf32, #tpu.memory_space<vmem>>, vector<2x32xf32>
      tpu.vector_store %arg16[%c0_53, %c0_54], %85 {strides = array<i32>} : memref<2x32xf32, #tpu.memory_space<vmem>>, vector<2x32xf32>,
      %cst_55 = arith.constant 0.000000e+00 : f32
      %87 = vector.broadcast %cst_55 : f32 to vector<2x32xf32>
      %c0_56 = arith.constant 0 : index
      %c0_57 = arith.constant 0 : index
      %88 = vector.load %arg17[%c0_56, %c0_57] : memref<2x32xf32, #tpu.memory_space<vmem>>, vector<2x32xf32>
      tpu.vector_store %arg17[%c0_56, %c0_57], %87 {strides = array<i32>} : memref<2x32xf32, #tpu.memory_space<vmem>>, vector<2x32xf32>,
    } else {
    }
    %c0 = arith.constant 0 : index
    %c0_1 = arith.constant 0 : index
    %c0_2 = arith.constant 0 : index
    %3 = vector.load %arg2[%c0, %c0_1, %c0_2] : memref<8x2x32xf32, #tpu.memory_space<vmem>>, vector<8x2x32xf32>
    %c0_3 = arith.constant 0 : index
    %c0_4 = arith.constant 0 : index
    %4 = vector.load %arg3[%c0_3, %c0_4] : memref<1x32xf32, #tpu.memory_space<vmem>>, vector<1x32xf32>
    %c0_5 = arith.constant 0 : index
    %c0_6 = arith.constant 0 : index
    %5 = vector.load %arg4[%c0_5, %c0_6] : memref<1x32xf32, #tpu.memory_space<vmem>>, vector<1x32xf32>
    %cst = arith.constant dense<0.000000e+00> : vector<8x2xf32>
    %6 = vector.multi_reduction <add>, %3, %cst [2] : vector<8x2x32xf32> to vector<8x2xf32>
    %7 = vector.shape_cast %6 : vector<8x2xf32> to vector<8x2x1xf32>
    %cst_7 = arith.constant 3.200000e+01 : f32
    %8 = vector.broadcast %cst_7 : f32 to vector<8x2x1xf32>
    %9 = arith.divf %7, %8 : vector<8x2x1xf32>
    %10 = vector.broadcast %9 : vector<8x2x1xf32> to vector<8x2x32xf32>
    %11 = arith.subf %3, %10 : vector<8x2x32xf32>
    %12 = arith.mulf %11, %11 : vector<8x2x32xf32>
    %cst_8 = arith.constant dense<0.000000e+00> : vector<8x2xf32>
    %13 = vector.multi_reduction <add>, %12, %cst_8 [2] : vector<8x2x32xf32> to vector<8x2xf32>
    %14 = vector.shape_cast %13 : vector<8x2xf32> to vector<8x2x1xf32>
    %cst_9 = arith.constant 3.200000e+01 : f32
    %15 = vector.broadcast %cst_9 : f32 to vector<8x2x1xf32>
    %16 = arith.divf %14, %15 : vector<8x2x1xf32>
    %17 = vector.broadcast %9 : vector<8x2x1xf32> to vector<8x2x32xf32>
    %18 = arith.subf %3, %17 : vector<8x2x32xf32>
    %cst_10 = arith.constant 9.99999974E-6 : f32
    %19 = vector.broadcast %cst_10 : f32 to vector<8x2x1xf32>
    %20 = arith.addf %16, %19 : vector<8x2x1xf32>
    %21 = math.rsqrt %20 : vector<8x2x1xf32>
    %22 = vector.broadcast %21 : vector<8x2x1xf32> to vector<8x2x32xf32>
    %23 = arith.mulf %18, %22 : vector<8x2x32xf32>
    %24 = vector.shape_cast %4 : vector<1x32xf32> to vector<1x1x32xf32>
    %25 = vector.broadcast %24 : vector<1x1x32xf32> to vector<8x2x32xf32>
    %26 = arith.mulf %23, %25 : vector<8x2x32xf32>
    %27 = vector.shape_cast %5 : vector<1x32xf32> to vector<1x1x32xf32>
    %28 = vector.broadcast %27 : vector<1x1x32xf32> to vector<8x2x32xf32>
    %29 = arith.addf %26, %28 : vector<8x2x32xf32>
    %c0_11 = arith.constant 0 : index
    %c0_12 = arith.constant 0 : index
    %30 = vector.load %arg5[%c0_11, %c0_12] : memref<32x128xf32, #tpu.memory_space<vmem>>, vector<32x128xf32>
    %31 = vector.shape_cast %29 : vector<8x2x32xf32> to vector<16x32xf32>
    %cst_13 = arith.constant dense<0.000000e+00> : vector<16x128xf32>
    %32 = tpu.matmul %31, %30, %cst_13 {dimension_numbers = #tpu.dot_dimension_numbers<[1], [0], [0], [1], [0, 0, 1, 1], [], []>} : vector<16x32xf32>, vector<32x128xf32>, vector<16x128xf32> -> vector<16x128xf32>
    %c0_14 = arith.constant 0 : index
    %c0_15 = arith.constant 0 : index
    %33 = vector.load %arg7[%c0_14, %c0_15] : memref<1x128xf32, #tpu.memory_space<vmem>>, vector<1x128xf32>
    %34 = vector.broadcast %33 : vector<1x128xf32> to vector<16x128xf32>
    %35 = arith.addf %32, %34 : vector<16x128xf32>
    %36 = vector.shape_cast %35 : vector<16x128xf32> to vector<8x2x128xf32>
    %c0_16 = arith.constant 0 : index
    %c0_17 = arith.constant 0 : index
    %c0_18 = arith.constant 0 : index
    %37 = vector.load %arg15[%c0_16, %c0_17, %c0_18] : memref<8x2x128xf32, #tpu.memory_space<vmem>>, vector<8x2x128xf32>
    tpu.vector_store %arg15[%c0_16, %c0_17, %c0_18], %36 {strides = array<i32>} : memref<8x2x128xf32, #tpu.memory_space<vmem>>, vector<8x2x128xf32>,
    %c0_19 = arith.constant 0 : index
    %c0_20 = arith.constant 0 : index
    %38 = vector.load %arg6[%c0_19, %c0_20] : memref<32x128xf32, #tpu.memory_space<vmem>>, vector<32x128xf32>
    %c0_i32_21 = arith.constant 0 : i32
    %c8_i32 = arith.constant 8 : i32
    %39 = arith.addi %c0_i32_21, %c8_i32 : i32
    %c1_i32 = arith.constant 1 : i32
    scf.for %arg18 = %c0_i32_21 to %39 step %c1_i32  : i32 {
      %c0_52 = arith.constant 0 : index
      %c0_53 = arith.constant 0 : index
      %85 = vector.load %arg16[%c0_52, %c0_53] : memref<2x32xf32, #tpu.memory_space<vmem>>, vector<2x32xf32>
      %c0_54 = arith.constant 0 : index
      %c0_55 = arith.constant 0 : index
      %86 = vector.load %arg17[%c0_54, %c0_55] : memref<2x32xf32, #tpu.memory_space<vmem>>, vector<2x32xf32>
      %87 = arith.index_cast %arg18 : i32 to index
      %c0_56 = arith.constant 0 : index
      %c0_57 = arith.constant 0 : index
      %88 = vector.load %arg15[%87, %c0_56, %c0_57] : memref<8x2x128xf32, #tpu.memory_space<vmem>>, vector<1x2x128xf32>
      %89 = vector.shape_cast %88 : vector<1x2x128xf32> to vector<2x128xf32>
      %cst_58 = arith.constant dense<0.000000e+00> : vector<2x128xf32>
      %90 = tpu.matmul %85, %38, %cst_58 {dimension_numbers = #tpu.dot_dimension_numbers<[1], [0], [0], [1], [0, 0, 1, 1], [], []>} : vector<2x32xf32>, vector<32x128xf32>, vector<2x128xf32> -> vector<2x128xf32>
      %91 = arith.addf %89, %90 : vector<2x128xf32>
      %92 = vector.extract_strided_slice %91 {offsets = [0, 0], sizes = [2, 32], strides = [1, 1]} : vector<2x128xf32> to vector<2x32xf32>
      %93 = arith.negf %92 : vector<2x32xf32>
      %94 = math.exp %93 : vector<2x32xf32>
      %cst_59 = arith.constant 1.000000e+00 : f32
      %95 = vector.broadcast %cst_59 : f32 to vector<2x32xf32>
      %96 = arith.addf %95, %94 : vector<2x32xf32>
      %97 = arith.divf %95, %96 : vector<2x32xf32>
      %98 = vector.extract_strided_slice %91 {offsets = [0, 32], sizes = [2, 32], strides = [1, 1]} : vector<2x128xf32> to vector<2x32xf32>
      %99 = arith.negf %98 : vector<2x32xf32>
      %100 = math.exp %99 : vector<2x32xf32>
      %cst_60 = arith.constant 1.000000e+00 : f32
      %101 = vector.broadcast %cst_60 : f32 to vector<2x32xf32>
      %102 = arith.addf %101, %100 : vector<2x32xf32>
      %103 = arith.divf %101, %102 : vector<2x32xf32>
      %104 = vector.extract_strided_slice %91 {offsets = [0, 64], sizes = [2, 32], strides = [1, 1]} : vector<2x128xf32> to vector<2x32xf32>
      %105 = math.tanh %104 : vector<2x32xf32>
      %106 = vector.extract_strided_slice %91 {offsets = [0, 96], sizes = [2, 32], strides = [1, 1]} : vector<2x128xf32> to vector<2x32xf32>
      %107 = arith.negf %106 : vector<2x32xf32>
      %108 = math.exp %107 : vector<2x32xf32>
      %cst_61 = arith.constant 1.000000e+00 : f32
      %109 = vector.broadcast %cst_61 : f32 to vector<2x32xf32>
      %110 = arith.addf %109, %108 : vector<2x32xf32>
      %111 = arith.divf %109, %110 : vector<2x32xf32>
      %112 = arith.mulf %103, %86 : vector<2x32xf32>
      %113 = arith.mulf %97, %105 : vector<2x32xf32>
      %114 = arith.addf %112, %113 : vector<2x32xf32>
      %115 = math.tanh %114 : vector<2x32xf32>
      %116 = arith.mulf %111, %115 : vector<2x32xf32>
      %c0_62 = arith.constant 0 : index
      %c0_63 = arith.constant 0 : index
      %117 = vector.load %arg16[%c0_62, %c0_63] : memref<2x32xf32, #tpu.memory_space<vmem>>, vector<2x32xf32>
      tpu.vector_store %arg16[%c0_62, %c0_63], %116 {strides = array<i32>} : memref<2x32xf32, #tpu.memory_space<vmem>>, vector<2x32xf32>,
      %c0_64 = arith.constant 0 : index
      %c0_65 = arith.constant 0 : index
      %118 = vector.load %arg17[%c0_64, %c0_65] : memref<2x32xf32, #tpu.memory_space<vmem>>, vector<2x32xf32>
      tpu.vector_store %arg17[%c0_64, %c0_65], %114 {strides = array<i32>} : memref<2x32xf32, #tpu.memory_space<vmem>>, vector<2x32xf32>,
      %119 = arith.index_cast %arg18 : i32 to index
      %c0_66 = arith.constant 0 : index
      %c0_67 = arith.constant 0 : index
      %120 = vector.load %arg14[%119, %c0_66, %c0_67] : memref<8x2x32xf32, #tpu.memory_space<vmem>>, vector<1x2x32xf32>
      %121 = vector.shape_cast %120 : vector<1x2x32xf32> to vector<2x32xf32>
      %122 = vector.shape_cast %116 : vector<2x32xf32> to vector<1x2x32xf32>
      tpu.vector_store %arg14[%119, %c0_66, %c0_67], %122 {strides = array<i32>} : memref<8x2x32xf32, #tpu.memory_space<vmem>>, vector<1x2x32xf32>,
    }
    %c8_i32_22 = arith.constant 8 : i32
    %c0_23 = arith.constant 0 : index
    %c0_24 = arith.constant 0 : index
    %c0_25 = arith.constant 0 : index
    %40 = vector.load %arg2[%c0_23, %c0_24, %c0_25] : memref<8x2x32xf32, #tpu.memory_space<vmem>>, vector<8x2x32xf32>
    %c0_26 = arith.constant 0 : index
    %c0_27 = arith.constant 0 : index
    %c0_28 = arith.constant 0 : index
    %41 = vector.load %arg14[%c0_26, %c0_27, %c0_28] : memref<8x2x32xf32, #tpu.memory_space<vmem>>, vector<8x2x32xf32>
    %42 = arith.addf %40, %41 : vector<8x2x32xf32>
    %c0_29 = arith.constant 0 : index
    %c0_30 = arith.constant 0 : index
    %43 = vector.load %arg8[%c0_29, %c0_30] : memref<1x32xf32, #tpu.memory_space<vmem>>, vector<1x32xf32>
    %c0_31 = arith.constant 0 : index
    %c0_32 = arith.constant 0 : index
    %44 = vector.load %arg9[%c0_31, %c0_32] : memref<1x32xf32, #tpu.memory_space<vmem>>, vector<1x32xf32>
    %cst_33 = arith.constant dense<0.000000e+00> : vector<8x2xf32>
    %45 = vector.multi_reduction <add>, %42, %cst_33 [2] : vector<8x2x32xf32> to vector<8x2xf32>
    %46 = vector.shape_cast %45 : vector<8x2xf32> to vector<8x2x1xf32>
    %cst_34 = arith.constant 3.200000e+01 : f32
    %47 = vector.broadcast %cst_34 : f32 to vector<8x2x1xf32>
    %48 = arith.divf %46, %47 : vector<8x2x1xf32>
    %49 = vector.broadcast %48 : vector<8x2x1xf32> to vector<8x2x32xf32>
    %50 = arith.subf %42, %49 : vector<8x2x32xf32>
    %51 = arith.mulf %50, %50 : vector<8x2x32xf32>
    %cst_35 = arith.constant dense<0.000000e+00> : vector<8x2xf32>
    %52 = vector.multi_reduction <add>, %51, %cst_35 [2] : vector<8x2x32xf32> to vector<8x2xf32>
    %53 = vector.shape_cast %52 : vector<8x2xf32> to vector<8x2x1xf32>
    %cst_36 = arith.constant 3.200000e+01 : f32
    %54 = vector.broadcast %cst_36 : f32 to vector<8x2x1xf32>
    %55 = arith.divf %53, %54 : vector<8x2x1xf32>
    %56 = vector.broadcast %48 : vector<8x2x1xf32> to vector<8x2x32xf32>
    %57 = arith.subf %42, %56 : vector<8x2x32xf32>
    %cst_37 = arith.constant 9.99999974E-6 : f32
    %58 = vector.broadcast %cst_37 : f32 to vector<8x2x1xf32>
    %59 = arith.addf %55, %58 : vector<8x2x1xf32>
    %60 = math.rsqrt %59 : vector<8x2x1xf32>
    %61 = vector.broadcast %60 : vector<8x2x1xf32> to vector<8x2x32xf32>
    %62 = arith.mulf %57, %61 : vector<8x2x32xf32>
    %63 = vector.shape_cast %43 : vector<1x32xf32> to vector<1x1x32xf32>
    %64 = vector.broadcast %63 : vector<1x1x32xf32> to vector<8x2x32xf32>
    %65 = arith.mulf %62, %64 : vector<8x2x32xf32>
    %66 = vector.shape_cast %44 : vector<1x32xf32> to vector<1x1x32xf32>
    %67 = vector.broadcast %66 : vector<1x1x32xf32> to vector<8x2x32xf32>
    %68 = arith.addf %65, %67 : vector<8x2x32xf32>
    %c0_38 = arith.constant 0 : index
    %c0_39 = arith.constant 0 : index
    %69 = vector.load %arg10[%c0_38, %c0_39] : memref<32x128xf32, #tpu.memory_space<vmem>>, vector<32x128xf32>
    %c0_40 = arith.constant 0 : index
    %c0_41 = arith.constant 0 : index
    %70 = vector.load %arg12[%c0_40, %c0_41] : memref<128x32xf32, #tpu.memory_space<vmem>>, vector<128x32xf32>
    %71 = vector.shape_cast %68 : vector<8x2x32xf32> to vector<16x32xf32>
    %cst_42 = arith.constant dense<0.000000e+00> : vector<16x128xf32>
    %72 = tpu.matmul %71, %69, %cst_42 {dimension_numbers = #tpu.dot_dimension_numbers<[1], [0], [0], [1], [0, 0, 1, 1], [], []>} : vector<16x32xf32>, vector<32x128xf32>, vector<16x128xf32> -> vector<16x128xf32>
    %c0_43 = arith.constant 0 : index
    %c0_44 = arith.constant 0 : index
    %73 = vector.load %arg11[%c0_43, %c0_44] : memref<1x128xf32, #tpu.memory_space<vmem>>, vector<1x128xf32>
    %74 = vector.broadcast %73 : vector<1x128xf32> to vector<16x128xf32>
    %75 = arith.addf %72, %74 : vector<16x128xf32>
    %cst_45 = arith.constant 0.000000e+00 : f32
    %76 = vector.broadcast %cst_45 : f32 to vector<16x128xf32>
    %77 = arith.maximumf %75, %76 : vector<16x128xf32>
    %cst_46 = arith.constant dense<0.000000e+00> : vector<16x32xf32>
    %78 = tpu.matmul %77, %70, %cst_46 {dimension_numbers = #tpu.dot_dimension_numbers<[1], [0], [0], [1], [0, 0, 1, 1], [], []>} : vector<16x128xf32>, vector<128x32xf32>, vector<16x32xf32> -> vector<16x32xf32>
    %c0_47 = arith.constant 0 : index
    %c0_48 = arith.constant 0 : index
    %79 = vector.load %arg13[%c0_47, %c0_48] : memref<1x32xf32, #tpu.memory_space<vmem>>, vector<1x32xf32>
    %80 = vector.broadcast %79 : vector<1x32xf32> to vector<16x32xf32>
    %81 = arith.addf %78, %80 : vector<16x32xf32>
    %82 = vector.shape_cast %81 : vector<16x32xf32> to vector<8x2x32xf32>
    %83 = arith.addf %42, %82 : vector<8x2x32xf32>
    %c0_49 = arith.constant 0 : index
    %c0_50 = arith.constant 0 : index
    %c0_51 = arith.constant 0 : index
    %84 = vector.load %arg14[%c0_49, %c0_50, %c0_51] : memref<8x2x32xf32, #tpu.memory_space<vmem>>, vector<8x2x32xf32>
    tpu.vector_store %arg14[%c0_49, %c0_50, %c0_51], %83 {strides = array<i32>} : memref<8x2x32xf32, #tpu.memory_space<vmem>>, vector<8x2x32xf32>,
    return
  }
  func.func @transform_0(%arg0: i32, %arg1: i32) -> (i32, i32, i32) {
    %c0_i32 = arith.constant 0 : i32
    %c0_i32_0 = arith.constant 0 : i32
    return %arg1, %arg0, %c0_i32 : i32, i32, i32
  }
  func.func @transform_1(%arg0: i32, %arg1: i32) -> (i32, i32) {
    %c0_i32 = arith.constant 0 : i32
    %c0_i32_0 = arith.constant 0 : i32
    %c0_i32_1 = arith.constant 0 : i32
    return %c0_i32, %c0_i32_0 : i32, i32
  }
  func.func @transform_2(%arg0: i32, %arg1: i32) -> (i32, i32) {
    %c0_i32 = arith.constant 0 : i32
    %c0_i32_0 = arith.constant 0 : i32
    %c0_i32_1 = arith.constant 0 : i32
    return %c0_i32, %c0_i32_0 : i32, i32
  }
  func.func @transform_3(%arg0: i32, %arg1: i32) -> (i32, i32) {
    %c0_i32 = arith.constant 0 : i32
    %c0_i32_0 = arith.constant 0 : i32
    %c0_i32_1 = arith.constant 0 : i32
    return %c0_i32, %c0_i32_0 : i32, i32
  }
  func.func @transform_4(%arg0: i32, %arg1: i32) -> (i32, i32) {
    %c0_i32 = arith.constant 0 : i32
    %c0_i32_0 = arith.constant 0 : i32
    %c0_i32_1 = arith.constant 0 : i32
    return %c0_i32, %c0_i32_0 : i32, i32
  }
  func.func @transform_5(%arg0: i32, %arg1: i32) -> (i32, i32) {
    %c0_i32 = arith.constant 0 : i32
    %c0_i32_0 = arith.constant 0 : i32
    %c0_i32_1 = arith.constant 0 : i32
    return %c0_i32, %c0_i32_0 : i32, i32
  }
  func.func @transform_6(%arg0: i32, %arg1: i32) -> (i32, i32) {
    %c0_i32 = arith.constant 0 : i32
    %c0_i32_0 = arith.constant 0 : i32
    %c0_i32_1 = arith.constant 0 : i32
    return %c0_i32, %c0_i32_0 : i32, i32
  }
  func.func @transform_7(%arg0: i32, %arg1: i32) -> (i32, i32) {
    %c0_i32 = arith.constant 0 : i32
    %c0_i32_0 = arith.constant 0 : i32
    %c0_i32_1 = arith.constant 0 : i32
    return %c0_i32, %c0_i32_0 : i32, i32
  }
  func.func @transform_8(%arg0: i32, %arg1: i32) -> (i32, i32) {
    %c0_i32 = arith.constant 0 : i32
    %c0_i32_0 = arith.constant 0 : i32
    %c0_i32_1 = arith.constant 0 : i32
    return %c0_i32, %c0_i32_0 : i32, i32
  }
  func.func @transform_9(%arg0: i32, %arg1: i32) -> (i32, i32) {
    %c0_i32 = arith.constant 0 : i32
    %c0_i32_0 = arith.constant 0 : i32
    %c0_i32_1 = arith.constant 0 : i32
    return %c0_i32, %c0_i32_0 : i32, i32
  }
  func.func @transform_10(%arg0: i32, %arg1: i32) -> (i32, i32) {
    %c0_i32 = arith.constant 0 : i32
    %c0_i32_0 = arith.constant 0 : i32
    %c0_i32_1 = arith.constant 0 : i32
    return %c0_i32, %c0_i32_0 : i32, i32
  }
  func.func @transform_11(%arg0: i32, %arg1: i32) -> (i32, i32) {
    %c0_i32 = arith.constant 0 : i32
    %c0_i32_0 = arith.constant 0 : i32
    %c0_i32_1 = arith.constant 0 : i32
    return %c0_i32, %c0_i32_0 : i32, i32
  }
  func.func @transform_12(%arg0: i32, %arg1: i32) -> (i32, i32, i32) {
    %c0_i32 = arith.constant 0 : i32
    %c0_i32_0 = arith.constant 0 : i32
    return %arg1, %arg0, %c0_i32 : i32, i32, i32
  }
}

</mosaic_0001>

<llo_original>
// kernel: tpu_custom_call.1
$region0: #{tpu_custom_call.1}
  #allocation0 [shape = 'u32[]', space=smem, size = 0x4, offset = 0x4, fixed_abs, tag = 'smem constant byte address 0x4 - core index']
  #allocation1 [shape = 'u32[72,128]{1,0:T(1,128)}', space=vmem, size = 0x9000, scoped, tag = 'internal scratch']
  #allocation2 [shape = 'f32[8,2,128]{2,1,0:T(2,128)}', space=vmem, size = 0x2000, scoped, tag = 'scratch operand']
  #allocation3 [shape = 'f32[2,32]{1,0:T(2,128)}', space=vmem, size = 0x400, scoped, tag = 'scratch operand']
  #allocation4 [shape = 'f32[2,32]{1,0:T(2,128)}', space=vmem, size = 0x400, scoped, tag = 'scratch operand']
  %s0 = inlined_call_operand.vmem [shape: f32[8,2,32], index: 0, kind: input, shape index: {}]
  %s1 = inlined_call_operand.vmem [shape: f32[1,32], index: 1, kind: input, shape index: {}]
  %s2 = inlined_call_operand.vmem [shape: f32[1,32], index: 2, kind: input, shape index: {}]
  %s3 = inlined_call_operand.vmem [shape: f32[32,128], index: 3, kind: input, shape index: {}]
  %s4 = inlined_call_operand.vmem [shape: f32[32,128], index: 4, kind: input, shape index: {}]
  %s5 = inlined_call_operand.vmem [shape: f32[1,128], index: 5, kind: input, shape index: {}]
  %s6 = inlined_call_operand.vmem [shape: f32[1,32], index: 6, kind: input, shape index: {}]
  %s7 = inlined_call_operand.vmem [shape: f32[1,32], index: 7, kind: input, shape index: {}]
  %s8 = inlined_call_operand.vmem [shape: f32[32,128], index: 8, kind: input, shape index: {}]
  %s9 = inlined_call_operand.vmem [shape: f32[1,128], index: 9, kind: input, shape index: {}]
  %s10 = inlined_call_operand.vmem [shape: f32[128,32], index: 10, kind: input, shape index: {}]
  %s11 = inlined_call_operand.vmem [shape: f32[1,32], index: 11, kind: input, shape index: {}]
  %s12 = inlined_call_operand.hbm [shape: f32[8,2,32], index: 12, kind: output, shape index: {}]
  %s13 = sld [smem:[#allocation0]]
  $region69: #{tpu_custom_call.1} parent=0
    _
  %s15 = ssub.s32 1, %s13
  %s16 = scalar_select 0, %s15, %s13
  $region1: #{tpu_custom_call.1} parent=0
    #allocation5 [shape = 'u8[8192]{0}', space=vmem, size = 0x2000, scoped, tag = 'output window, operand 0, single buffered']
    #allocation6 [shape = 's32[1]{0}', space=sflag, size = 0x4, scoped, tag = 'scoped memory for tpu_custom_call.1']
    %17 = vsyncpa [#allocation6], 0
    // Predicated region
    $region2: #{tpu_custom_call.1} parent=1 // pred_check
      _
    $region3: #{tpu_custom_call.1} parent=1 // pred_check_branch
      %19 = sbr.rel (0) target = $region5
    $region4: #{tpu_custom_call.1} parent=1 // pred_region
      _
    $region5: #{tpu_custom_call.1} parent=1 // pred_fallthru
      _
    // Predicated region
    $region6: #{tpu_custom_call.1} parent=1 // pred_check
      _
    $region7: #{tpu_custom_call.1} parent=1 // pred_check_branch
      %21 = sbr.rel (0) target = $region9
    $region8: #{tpu_custom_call.1} parent=1 // pred_region
      _
    $region9: #{tpu_custom_call.1} parent=1 // pred_fallthru
      _
    // Predicated region
    $region10: #{tpu_custom_call.1} parent=1 // pred_check
      _
    $region11: #{tpu_custom_call.1} parent=1 // pred_check_branch
      %23 = sbr.rel (0) target = $region13
    $region12: #{tpu_custom_call.1} parent=1 // pred_region
      _
    $region13: #{tpu_custom_call.1} parent=1 // pred_fallthru
      _
    // Predicated region
    $region14: #{tpu_custom_call.1} parent=1 // pred_check
      _
    $region15: #{tpu_custom_call.1} parent=1 // pred_check_branch
      %25 = sbr.rel (0) target = $region17
    $region16: #{tpu_custom_call.1} parent=1 // pred_region
      _
    $region17: #{tpu_custom_call.1} parent=1 // pred_fallthru
      _
    // Predicated region
    $region18: #{tpu_custom_call.1} parent=1 // pred_check
      _
    $region19: #{tpu_custom_call.1} parent=1 // pred_check_branch
      %27 = sbr.rel (0) target = $region21
    $region20: #{tpu_custom_call.1} parent=1 // pred_region
      _
    $region21: #{tpu_custom_call.1} parent=1 // pred_fallthru
      _
    // Predicated region
    $region22: #{tpu_custom_call.1} parent=1 // pred_check
      _
    $region23: #{tpu_custom_call.1} parent=1 // pred_check_branch
      %29 = sbr.rel (0) target = $region25
    $region24: #{tpu_custom_call.1} parent=1 // pred_region
      _
    $region25: #{tpu_custom_call.1} parent=1 // pred_fallthru
      _
    // Predicated region
    $region26: #{tpu_custom_call.1} parent=1 // pred_check
      _
    $region27: #{tpu_custom_call.1} parent=1 // pred_check_branch
      %31 = sbr.rel (0) target = $region29
    $region28: #{tpu_custom_call.1} parent=1 // pred_region
      _
    $region29: #{tpu_custom_call.1} parent=1 // pred_fallthru
      _
    // Predicated region
    $region30: #{tpu_custom_call.1} parent=1 // pred_check
      _
    $region31: #{tpu_custom_call.1} parent=1 // pred_check_branch
      %33 = sbr.rel (0) target = $region33
    $region32: #{tpu_custom_call.1} parent=1 // pred_region
      _
    $region33: #{tpu_custom_call.1} parent=1 // pred_fallthru
      _
    // Predicated region
    $region34: #{tpu_custom_call.1} parent=1 // pred_check
      _
    $region35: #{tpu_custom_call.1} parent=1 // pred_check_branch
      %35 = sbr.rel (0) target = $region37
    $region36: #{tpu_custom_call.1} parent=1 // pred_region
      _
    $region37: #{tpu_custom_call.1} parent=1 // pred_fallthru
      _
    // Predicated region
    $region38: #{tpu_custom_call.1} parent=1 // pred_check
      _
    $region39: #{tpu_custom_call.1} parent=1 // pred_check_branch
      %37 = sbr.rel (0) target = $region41
    $region40: #{tpu_custom_call.1} parent=1 // pred_region
      _
    $region41: #{tpu_custom_call.1} parent=1 // pred_fallthru
      _
    // Predicated region
    $region42: #{tpu_custom_call.1} parent=1 // pred_check
      _
    $region43: #{tpu_custom_call.1} parent=1 // pred_check_branch
      %39 = sbr.rel (0) target = $region45
    $region44: #{tpu_custom_call.1} parent=1 // pred_region
      _
    $region45: #{tpu_custom_call.1} parent=1 // pred_fallthru
      _
    // Predicated region
    $region46: #{tpu_custom_call.1} parent=1 // pred_check
      _
    $region47: #{tpu_custom_call.1} parent=1 // pred_check_branch
      %41 = sbr.rel (0) target = $region49
    $region48: #{tpu_custom_call.1} parent=1 // pred_region
      _
    $region49: #{tpu_custom_call.1} parent=1 // pred_fallthru
      _
    %p42 = scmp.eq.s32.totalorder 0, 0
    // Predicated region
    $region50: #{tpu_custom_call.1} parent=1 // pred_check
      %p43 = pneg %p42
    $region51: #{tpu_custom_call.1} parent=1 // pred_check_branch
      %45 = sbr.rel (%p43) target = $region53
    $region52: #{tpu_custom_call.1} parent=1 // pred_region
      %vm46 = vcmask 254976
      %47 = vst.msk [vmem:[#allocation3] sm:$0x3] %vm46, 0.0
      %48 = vst.msk [vmem:[#allocation4] sm:$0x3] %vm46, 0.0
    $region53: #{tpu_custom_call.1} parent=1 // pred_fallthru
      _
    %v49 = vld [vmem:[%s0] sm:$0x3]
    %v50 = vld [vmem:[%s0 + $0x2] sm:$0x3]
    %v51 = vld [vmem:[%s0 + $0x4] sm:$0x3]
    %v52 = vld [vmem:[%s0 + $0x6] sm:$0x3]
    %v53 = vld [vmem:[%s0 + $0x8] sm:$0x3]
    %v54 = vld [vmem:[%s0 + $0xa] sm:$0x3]
    %v55 = vld [vmem:[%s0 + $0xc] sm:$0x3]
    %v56 = vld [vmem:[%s0 + $0xe] sm:$0x3]
    %v57 = vld [vmem:[%s1] sm:$0x1]
    %v58 = vld [vmem:[%s2] sm:$0x1]
    %vm59 = vcmask 254976
    %v60 = vsel %vm59, %v49, 0.0
    %61 = vadd.xlane.f32.xlu0 %v60
    %v62 = vpop.xlane.xlu0 %61
    %v63 = vsel %vm59, %v50, 0.0
    %64 = vadd.xlane.f32.xlu0 %v63
    %v65 = vpop.xlane.xlu0 %64
    %v66 = vsel %vm59, %v51, 0.0
    %67 = vadd.xlane.f32.xlu0 %v66
    %v68 = vpop.xlane.xlu0 %67
    %v69 = vsel %vm59, %v52, 0.0
    %70 = vadd.xlane.f32.xlu0 %v69
    %v71 = vpop.xlane.xlu0 %70
    %v72 = vsel %vm59, %v53, 0.0
    %73 = vadd.xlane.f32.xlu0 %v72
    %v74 = vpop.xlane.xlu0 %73
    %v75 = vsel %vm59, %v54, 0.0
    %76 = vadd.xlane.f32.xlu0 %v75
    %v77 = vpop.xlane.xlu0 %76
    %v78 = vsel %vm59, %v55, 0.0
    %79 = vadd.xlane.f32.xlu0 %v78
    %v80 = vpop.xlane.xlu0 %79
    %v81 = vsel %vm59, %v56, 0.0
    %82 = vadd.xlane.f32.xlu0 %v81
    %v83 = vpop.xlane.xlu0 %82
    %v84 = vrcp.pop 32.0
    %v85 = vmul.f32 32.0, %v84
    %v86 = vsub.f32 1.0, %v85
    %v87 = vmul.f32 %v84, %v86
    %v88 = vadd.f32 %v84, %v87
    %vm89 = vweird.f32 %v84
    %v90 = vsel %vm89, %v84, %v88
    %v91 = vmul.f32 %v62, %v90
    %v92 = vmul.f32 %v65, %v90
    %v93 = vmul.f32 %v68, %v90
    %v94 = vmul.f32 %v71, %v90
    %v95 = vmul.f32 %v74, %v90
    %v96 = vmul.f32 %v77, %v90
    %v97 = vmul.f32 %v80, %v90
    %v98 = vmul.f32 %v83, %v90
    %v99 = vsub.f32 %v49, %v91
    %v100 = vsub.f32 %v50, %v92
    %v101 = vsub.f32 %v51, %v93
    %v102 = vsub.f32 %v52, %v94
    %v103 = vsub.f32 %v53, %v95
    %v104 = vsub.f32 %v54, %v96
    %v105 = vsub.f32 %v55, %v97
    %v106 = vsub.f32 %v56, %v98
    %v107 = vmul.f32 %v99, %v99
    %v108 = vmul.f32 %v100, %v100
    %v109 = vmul.f32 %v101, %v101
    %v110 = vmul.f32 %v102, %v102
    %v111 = vmul.f32 %v103, %v103
    %v112 = vmul.f32 %v104, %v104
    %v113 = vmul.f32 %v105, %v105
    %v114 = vmul.f32 %v106, %v106
    %v115 = vsel %vm59, %v107, 0.0
    %116 = vadd.xlane.f32.xlu0 %v115
    %v117 = vpop.xlane.xlu0 %116
    %v118 = vsel %vm59, %v108, 0.0
    %119 = vadd.xlane.f32.xlu0 %v118
    %v120 = vpop.xlane.xlu0 %119
    %v121 = vsel %vm59, %v109, 0.0
    %122 = vadd.xlane.f32.xlu0 %v121
    %v123 = vpop.xlane.xlu0 %122
    %v124 = vsel %vm59, %v110, 0.0
    %125 = vadd.xlane.f32.xlu0 %v124
    %v126 = vpop.xlane.xlu0 %125
    %v127 = vsel %vm59, %v111, 0.0
    %128 = vadd.xlane.f32.xlu0 %v127
    %v129 = vpop.xlane.xlu0 %128
    %v130 = vsel %vm59, %v112, 0.0
    %131 = vadd.xlane.f32.xlu0 %v130
    %v132 = vpop.xlane.xlu0 %131
    %v133 = vsel %vm59, %v113, 0.0
    %134 = vadd.xlane.f32.xlu0 %v133
    %v135 = vpop.xlane.xlu0 %134
    %v136 = vsel %vm59, %v114, 0.0
    %137 = vadd.xlane.f32.xlu0 %v136
    %v138 = vpop.xlane.xlu0 %137
    %v139 = vmul.f32 %v117, %v90
    %v140 = vmul.f32 %v120, %v90
    %v141 = vmul.f32 %v123, %v90
    %v142 = vmul.f32 %v126, %v90
    %v143 = vmul.f32 %v129, %v90
    %v144 = vmul.f32 %v132, %v90
    %v145 = vmul.f32 %v135, %v90
    %v146 = vmul.f32 %v138, %v90
    %v147 = vadd.f32 %v139, 1e-05
    %v148 = vadd.f32 %v140, 1e-05
    %v149 = vadd.f32 %v141, 1e-05
    %v150 = vadd.f32 %v142, 1e-05
    %v151 = vadd.f32 %v143, 1e-05
    %v152 = vadd.f32 %v144, 1e-05
    %v153 = vadd.f32 %v145, 1e-05
    %v154 = vadd.f32 %v146, 1e-05
    %v155 = vrsqrt.pop %v147
    %v156 = vmul.f32 %v155, %v147
    %v157 = vmul.f32 %v156, %v155
    %v158 = vmul.f32 0.5, %v157
    %v159 = vsub.f32 1.5, %v158
    %v160 = vmul.f32 %v155, %v159
    %vm161 = vweird.f32 %v147
    %vm162 = vweird.f32 %v155
    %vm163 = vmor %vm161, %vm162
    %v164 = vsel %vm163, %v155, %v160
    %v165 = vrsqrt.pop %v148
    %v166 = vmul.f32 %v165, %v148
    %v167 = vmul.f32 %v166, %v165
    %v168 = vmul.f32 0.5, %v167
    %v169 = vsub.f32 1.5, %v168
    %v170 = vmul.f32 %v165, %v169
    %vm171 = vweird.f32 %v148
    %vm172 = vweird.f32 %v165
    %vm173 = vmor %vm171, %vm172
    %v174 = vsel %vm173, %v165, %v170
    %v175 = vrsqrt.pop %v149
    %v176 = vmul.f32 %v175, %v149
    %v177 = vmul.f32 %v176, %v175
    %v178 = vmul.f32 0.5, %v177
    %v179 = vsub.f32 1.5, %v178
    %v180 = vmul.f32 %v175, %v179
    %vm181 = vweird.f32 %v149
    %vm182 = vweird.f32 %v175
    %vm183 = vmor %vm181, %vm182
    %v184 = vsel %vm183, %v175, %v180
    %v185 = vrsqrt.pop %v150
    %v186 = vmul.f32 %v185, %v150
    %v187 = vmul.f32 %v186, %v185
    %v188 = vmul.f32 0.5, %v187
    %v189 = vsub.f32 1.5, %v188
    %v190 = vmul.f32 %v185, %v189
    %vm191 = vweird.f32 %v150
    %vm192 = vweird.f32 %v185
    %vm193 = vmor %vm191, %vm192
    %v194 = vsel %vm193, %v185, %v190
    %v195 = vrsqrt.pop %v151
    %v196 = vmul.f32 %v195, %v151
    %v197 = vmul.f32 %v196, %v195
    %v198 = vmul.f32 0.5, %v197
    %v199 = vsub.f32 1.5, %v198
    %v200 = vmul.f32 %v195, %v199
    %vm201 = vweird.f32 %v151
    %vm202 = vweird.f32 %v195
    %vm203 = vmor %vm201, %vm202
    %v204 = vsel %vm203, %v195, %v200
    %v205 = vrsqrt.pop %v152
    %v206 = vmul.f32 %v205, %v152
    %v207 = vmul.f32 %v206, %v205
    %v208 = vmul.f32 0.5, %v207
    %v209 = vsub.f32 1.5, %v208
    %v210 = vmul.f32 %v205, %v209
    %vm211 = vweird.f32 %v152
    %vm212 = vweird.f32 %v205
    %vm213 = vmor %vm211, %vm212
    %v214 = vsel %vm213, %v205, %v210
    %v215 = vrsqrt.pop %v153
    %v216 = vmul.f32 %v215, %v153
    %v217 = vmul.f32 %v216, %v215
    %v218 = vmul.f32 0.5, %v217
    %v219 = vsub.f32 1.5, %v218
    %v220 = vmul.f32 %v215, %v219
    %vm221 = vweird.f32 %v153
    %vm222 = vweird.f32 %v215
    %vm223 = vmor %vm221, %vm222
    %v224 = vsel %vm223, %v215, %v220
    %v225 = vrsqrt.pop %v154
    %v226 = vmul.f32 %v225, %v154
    %v227 = vmul.f32 %v226, %v225
    %v228 = vmul.f32 0.5, %v227
    %v229 = vsub.f32 1.5, %v228
    %v230 = vmul.f32 %v225, %v229
    %vm231 = vweird.f32 %v154
    %vm232 = vweird.f32 %v225
    %vm233 = vmor %vm231, %vm232
    %v234 = vsel %vm233, %v225, %v230
    %v235 = vmul.f32 %v99, %v164
    %v236 = vmul.f32 %v100, %v174
    %v237 = vmul.f32 %v101, %v184
    %v238 = vmul.f32 %v102, %v194
    %v239 = vmul.f32 %v103, %v204
    %v240 = vmul.f32 %v104, %v214
    %v241 = vmul.f32 %v105, %v224
    %v242 = vmul.f32 %v106, %v234
    %v244 = vperm.slane %v57, 0
    %v246 = vmul.f32 %v235, %v244
    %v247 = vmul.f32 %v236, %v244
    %v248 = vmul.f32 %v237, %v244
    %v249 = vmul.f32 %v238, %v244
    %v250 = vmul.f32 %v239, %v244
    %v251 = vmul.f32 %v240, %v244
    %v252 = vmul.f32 %v241, %v244
    %v253 = vmul.f32 %v242, %v244
    %v255 = vperm.slane %v58, 0
    %v257 = vadd.f32 %v246, %v255
    %v258 = vadd.f32 %v247, %v255
    %v259 = vadd.f32 %v248, %v255
    %v260 = vadd.f32 %v249, %v255
    %v261 = vadd.f32 %v250, %v255
    %v262 = vadd.f32 %v251, %v255
    %v263 = vadd.f32 %v252, %v255
    %v264 = vadd.f32 %v253, %v255
    %v265 = vld [vmem:[%s3] sm:$0xff]
    %v266 = vld [vmem:[%s3 + $0x8] sm:$0xff]
    %v267 = vld [vmem:[%s3 + $0x10] sm:$0xff]
    %v268 = vld [vmem:[%s3 + $0x18] sm:$0xff]
    %v269 = vld [vmem:[%s5] sm:$0x1]
    %v271 = vperm.slane %v269, 0
    %281 = vst [vmem:[#allocation1] ss:$4 sm:$0xff] %v257
    %s282 = scalar_lea.vmem [#allocation1], 1
    %283 = vst [vmem:[%s282] ss:$4 sm:$0xff] %v258
    %s284 = scalar_lea.vmem [#allocation1], 2
    %285 = vst [vmem:[%s284] ss:$4 sm:$0xff] %v259
    %s286 = scalar_lea.vmem [#allocation1], 3
    %287 = vst [vmem:[%s286] ss:$4 sm:$0xff] %v260
    %s288 = scalar_lea.vmem [#allocation1], 32
    %289 = vst [vmem:[%s288] ss:$4 sm:$0xff] %v261
    %s290 = scalar_lea.vmem [#allocation1], 33
    %291 = vst [vmem:[%s290] ss:$4 sm:$0xff] %v262
    %s292 = scalar_lea.vmem [#allocation1], 34
    %293 = vst [vmem:[%s292] ss:$4 sm:$0xff] %v263
    %s294 = scalar_lea.vmem [#allocation1], 35
    %295 = vst [vmem:[%s294] ss:$4 sm:$0xff] %v264
    %v296 = vld.sshfl [vmem:[#allocation1] sm:$0xff pattern:$0x73625140]
    %v297 = vld.sshfl [vmem:[#allocation1 + $0x20] sm:$0xff pattern:$0x73625140]
    %vm298 = vcmask 261120
    %v299 = vsel %vm298, %v296, 0
    %v301 = vsel %vm298, %v297, 0
    %303 = vmatpush.msra.mxu0 0.0
    %304 = vmatpush.msra.mxu0 0.0
    %305 = vmatpush.msra.mxu0 0.0
    %306 = vmatpush.msra.mxu0 0.0
    %307 = vmatpush.msra.mxu0 0.0
    %308 = vmatpush.msra.mxu0 0.0
    %309 = vmatpush.msra.mxu0 0.0
    %310 = vmatpush.msra.mxu0 0.0
    %311 = vmatpush.msra.mxu0 0.0
    %312 = vmatpush.msra.mxu0 0.0
    %313 = vmatpush.msra.mxu0 0.0
    %314 = vmatpush.msra.mxu0 0.0
    %315 = vmatpush.msra.mxu0 %v268
    %316 = vmatpush.msra.mxu0 %v267
    %317 = vmatpush.msra.mxu0 %v266
    %318 = vmatpush.msra.mxu0 %v265
    %319 = vmatmul.f32.gmra.mxu0 %v299
    %v320 = vpop.f32.mrf.mxu0
    %v321 = vadd.f32 %v271, %v320
    %322 = vmatmul.f32.gmra.mxu0 %v301
    %v323 = vpop.f32.mrf.mxu0
    %v324 = vadd.f32 %v271, %v323
    %325 = vdwg.mxu0
    %v328 = vrot.slane %v321, 2
    %v329 = vrot.slane %v321, 4
    %v330 = vrot.slane %v321, 6
    %v331 = vrot.slane %v324, 2
    %v332 = vrot.slane %v324, 4
    %v333 = vrot.slane %v324, 6
    %340 = vst [vmem:[#allocation2] sm:$0x3] %v321
    %341 = vst [vmem:[#allocation2 + $0x2] sm:$0x3] %v328
    %342 = vst [vmem:[#allocation2 + $0x4] sm:$0x3] %v329
    %343 = vst [vmem:[#allocation2 + $0x6] sm:$0x3] %v330
    %344 = vst [vmem:[#allocation2 + $0x8] sm:$0x3] %v324
    %345 = vst [vmem:[#allocation2 + $0xa] sm:$0x3] %v331
    %346 = vst [vmem:[#allocation2 + $0xc] sm:$0x3] %v332
    %347 = vst [vmem:[#allocation2 + $0xe] sm:$0x3] %v333
    %v348 = vld [vmem:[%s4] sm:$0xff]
    %v349 = vld [vmem:[%s4 + $0x8] sm:$0xff]
    %v350 = vld [vmem:[%s4 + $0x10] sm:$0xff]
    %v351 = vld [vmem:[%s4 + $0x18] sm:$0xff]
    loop: start=0, step=1, limit=8
    $region54: #{tpu_custom_call.1} parent=1 // loop_pre_header
      _
    $region55: #{tpu_custom_call.1} parent=1 // loop_header
      %s353 = sphi 0, %s357
      %p354 = scmp.ge.s32.totalorder %s353, 8
    $region56: #{tpu_custom_call.1} parent=1 // loop_header_branch
      %356 = sbr.rel (%p354) target = $region60
    $region57: #{tpu_custom_call.1} parent=1 // loop_body
      %v358 = vld [vmem:[#allocation3] sm:$0x3]
      %v359 = vld [vmem:[#allocation4] sm:$0x3]
      %s360 = smul.u32 %s353, 2
      %s361 = scalar_lea.vmem [#allocation2], %s360
      %v362 = vld [vmem:[%s361] sm:$0x3]
      %v364 = vsel %vm298, %v358, 0
      %366 = vmatpush.msra.mxu0 0.0
      %367 = vmatpush.msra.mxu0 0.0
      %368 = vmatpush.msra.mxu0 0.0
      %369 = vmatpush.msra.mxu0 0.0
      %370 = vmatpush.msra.mxu0 0.0
      %371 = vmatpush.msra.mxu0 0.0
      %372 = vmatpush.msra.mxu0 0.0
      %373 = vmatpush.msra.mxu0 0.0
      %374 = vmatpush.msra.mxu0 0.0
      %375 = vmatpush.msra.mxu0 0.0
      %376 = vmatpush.msra.mxu0 0.0
      %377 = vmatpush.msra.mxu0 0.0
      %378 = vmatpush.msra.mxu0 %v351
      %379 = vmatpush.msra.mxu0 %v350
      %380 = vmatpush.msra.mxu0 %v349
      %381 = vmatpush.msra.mxu0 %v348
      %382 = vmatmul.f32.gmra.mxu0 %v364
      %v383 = vpop.f32.mrf.mxu0
      %v384 = vadd.f32 0.0, %v383
      %385 = vdwg.mxu0
      %v386 = vadd.f32 %v362, %v384
      %v387 = vxor.u32 %v386, 2147483648
      %v388 = vmul.f32 %v387, 1.442695
      %v389 = vpow.pop %v388
      %v390 = vadd.f32 %v389, 1.0
      %v391 = vrcp.pop %v390
      %v392 = vmul.f32 %v390, %v391
      %v393 = vsub.f32 1.0, %v392
      %v394 = vmul.f32 %v391, %v393
      %v395 = vadd.f32 %v391, %v394
      %vm396 = vweird.f32 %v390
      %vm397 = vweird.f32 %v391
      %vm398 = vmor %vm396, %vm397
      %v399 = vsel %vm398, %v391, %v395
      %v400 = vand.u32 2147483647, %v390
      %vm401 = vcmp.eq.f32.partialorder %v400, 8.507059e+37
      %v402 = vand.u32 %v390, 2147483648
      %v403 = vor.u32 1.1754944e-38, %v402
      %v404 = vsel %vm401, %v403, %v399
      %v405 = vmul.f32 1.0, %v404
      %v406 = vtanh.pop %v386
      %408 = vrot.lane.b32.xlu0 %v359, 32
      %v409 = vpop.permute.xlu0 %408
      %v411 = vmul.f32 %v405, %v409
      %413 = vrot.lane.b32.xlu0 %v406, 64
      %v414 = vpop.permute.xlu0 %413
      %v416 = vmul.f32 %v405, %v414
      %418 = vrot.lane.b32.xlu0 %v416, 32
      %v419 = vpop.permute.xlu0 %418
      %v421 = vadd.f32 %v411, %v419
      %v422 = vtanh.pop %v421
      %424 = vrot.lane.b32.xlu0 %v422, 64
      %v425 = vpop.permute.xlu0 %424
      %v427 = vmul.f32 %v405, %v425
      %429 = vrot.lane.b32.xlu0 %v427, 32
      %v430 = vpop.permute.xlu0 %429
      %432 = vst.msk [vmem:[#allocation3] sm:$0x3] %vm59, %v430
      %434 = vrot.lane.b32.xlu0 %v421, 96
      %v435 = vpop.permute.xlu0 %434
      %437 = vst.msk [vmem:[#allocation4] sm:$0x3] %vm59, %v435
      %s438 = scalar_lea.vmem [#allocation5], %s360
      %439 = vst.msk [vmem:[%s438] sm:$0x3] %vm59, %v430
    $region58: #{tpu_custom_call.1} parent=1 // loop_footer
      %s357 = sadd.s32 1, %s353
    $region59: #{tpu_custom_call.1} parent=1 // loop_footer_branch
      %352 = sbr.rel target = $region55
    $region60: #{tpu_custom_call.1} parent=1 // loop_exit
      _
    %v440 = vld [vmem:[%s0] sm:$0x3]
    %v441 = vld [vmem:[%s0 + $0x2] sm:$0x3]
    %v442 = vld [vmem:[%s0 + $0x4] sm:$0x3]
    %v443 = vld [vmem:[%s0 + $0x6] sm:$0x3]
    %v444 = vld [vmem:[%s0 + $0x8] sm:$0x3]
    %v445 = vld [vmem:[%s0 + $0xa] sm:$0x3]
    %v446 = vld [vmem:[%s0 + $0xc] sm:$0x3]
    %v447 = vld [vmem:[%s0 + $0xe] sm:$0x3]
    %v448 = vld [vmem:[#allocation5] sm:$0x3]
    %v449 = vld [vmem:[#allocation5 + $0x2] sm:$0x3]
    %v450 = vld [vmem:[#allocation5 + $0x4] sm:$0x3]
    %v451 = vld [vmem:[#allocation5 + $0x6] sm:$0x3]
    %v452 = vld [vmem:[#allocation5 + $0x8] sm:$0x3]
    %v453 = vld [vmem:[#allocation5 + $0xa] sm:$0x3]
    %v454 = vld [vmem:[#allocation5 + $0xc] sm:$0x3]
    %v455 = vld [vmem:[#allocation5 + $0xe] sm:$0x3]
    %v456 = vadd.f32 %v440, %v448
    %v457 = vadd.f32 %v441, %v449
    %v458 = vadd.f32 %v442, %v450
    %v459 = vadd.f32 %v443, %v451
    %v460 = vadd.f32 %v444, %v452
    %v461 = vadd.f32 %v445, %v453
    %v462 = vadd.f32 %v446, %v454
    %v463 = vadd.f32 %v447, %v455
    %v464 = vld [vmem:[%s6] sm:$0x1]
    %v465 = vld [vmem:[%s7] sm:$0x1]
    %v466 = vsel %vm59, %v456, 0.0
    %467 = vadd.xlane.f32.xlu0 %v466
    %v468 = vpop.xlane.xlu0 %467
    %v469 = vsel %vm59, %v457, 0.0
    %470 = vadd.xlane.f32.xlu0 %v469
    %v471 = vpop.xlane.xlu0 %470
    %v472 = vsel %vm59, %v458, 0.0
    %473 = vadd.xlane.f32.xlu0 %v472
    %v474 = vpop.xlane.xlu0 %473
    %v475 = vsel %vm59, %v459, 0.0
    %476 = vadd.xlane.f32.xlu0 %v475
    %v477 = vpop.xlane.xlu0 %476
    %v478 = vsel %vm59, %v460, 0.0
    %479 = vadd.xlane.f32.xlu0 %v478
    %v480 = vpop.xlane.xlu0 %479
    %v481 = vsel %vm59, %v461, 0.0
    %482 = vadd.xlane.f32.xlu0 %v481
    %v483 = vpop.xlane.xlu0 %482
    %v484 = vsel %vm59, %v462, 0.0
    %485 = vadd.xlane.f32.xlu0 %v484
    %v486 = vpop.xlane.xlu0 %485
    %v487 = vsel %vm59, %v463, 0.0
    %488 = vadd.xlane.f32.xlu0 %v487
    %v489 = vpop.xlane.xlu0 %488
    %v490 = vmul.f32 %v468, %v90
    %v491 = vmul.f32 %v471, %v90
    %v492 = vmul.f32 %v474, %v90
    %v493 = vmul.f32 %v477, %v90
    %v494 = vmul.f32 %v480, %v90
    %v495 = vmul.f32 %v483, %v90
    %v496 = vmul.f32 %v486, %v90
    %v497 = vmul.f32 %v489, %v90
    %v498 = vsub.f32 %v456, %v490
    %v499 = vsub.f32 %v457, %v491
    %v500 = vsub.f32 %v458, %v492
    %v501 = vsub.f32 %v459, %v493
    %v502 = vsub.f32 %v460, %v494
    %v503 = vsub.f32 %v461, %v495
    %v504 = vsub.f32 %v462, %v496
    %v505 = vsub.f32 %v463, %v497
    %v506 = vmul.f32 %v498, %v498
    %v507 = vmul.f32 %v499, %v499
    %v508 = vmul.f32 %v500, %v500
    %v509 = vmul.f32 %v501, %v501
    %v510 = vmul.f32 %v502, %v502
    %v511 = vmul.f32 %v503, %v503
    %v512 = vmul.f32 %v504, %v504
    %v513 = vmul.f32 %v505, %v505
    %v514 = vsel %vm59, %v506, 0.0
    %515 = vadd.xlane.f32.xlu0 %v514
    %v516 = vpop.xlane.xlu0 %515
    %v517 = vsel %vm59, %v507, 0.0
    %518 = vadd.xlane.f32.xlu0 %v517
    %v519 = vpop.xlane.xlu0 %518
    %v520 = vsel %vm59, %v508, 0.0
    %521 = vadd.xlane.f32.xlu0 %v520
    %v522 = vpop.xlane.xlu0 %521
    %v523 = vsel %vm59, %v509, 0.0
    %524 = vadd.xlane.f32.xlu0 %v523
    %v525 = vpop.xlane.xlu0 %524
    %v526 = vsel %vm59, %v510, 0.0
    %527 = vadd.xlane.f32.xlu0 %v526
    %v528 = vpop.xlane.xlu0 %527
    %v529 = vsel %vm59, %v511, 0.0
    %530 = vadd.xlane.f32.xlu0 %v529
    %v531 = vpop.xlane.xlu0 %530
    %v532 = vsel %vm59, %v512, 0.0
    %533 = vadd.xlane.f32.xlu0 %v532
    %v534 = vpop.xlane.xlu0 %533
    %v535 = vsel %vm59, %v513, 0.0
    %536 = vadd.xlane.f32.xlu0 %v535
    %v537 = vpop.xlane.xlu0 %536
    %v538 = vmul.f32 %v516, %v90
    %v539 = vmul.f32 %v519, %v90
    %v540 = vmul.f32 %v522, %v90
    %v541 = vmul.f32 %v525, %v90
    %v542 = vmul.f32 %v528, %v90
    %v543 = vmul.f32 %v531, %v90
    %v544 = vmul.f32 %v534, %v90
    %v545 = vmul.f32 %v537, %v90
    %v546 = vadd.f32 %v538, 1e-05
    %v547 = vadd.f32 %v539, 1e-05
    %v548 = vadd.f32 %v540, 1e-05
    %v549 = vadd.f32 %v541, 1e-05
    %v550 = vadd.f32 %v542, 1e-05
    %v551 = vadd.f32 %v543, 1e-05
    %v552 = vadd.f32 %v544, 1e-05
    %v553 = vadd.f32 %v545, 1e-05
    %v554 = vrsqrt.pop %v546
    %v555 = vmul.f32 %v554, %v546
    %v556 = vmul.f32 %v555, %v554
    %v557 = vmul.f32 0.5, %v556
    %v558 = vsub.f32 1.5, %v557
    %v559 = vmul.f32 %v554, %v558
    %vm560 = vweird.f32 %v546
    %vm561 = vweird.f32 %v554
    %vm562 = vmor %vm560, %vm561
    %v563 = vsel %vm562, %v554, %v559
    %v564 = vrsqrt.pop %v547
    %v565 = vmul.f32 %v564, %v547
    %v566 = vmul.f32 %v565, %v564
    %v567 = vmul.f32 0.5, %v566
    %v568 = vsub.f32 1.5, %v567
    %v569 = vmul.f32 %v564, %v568
    %vm570 = vweird.f32 %v547
    %vm571 = vweird.f32 %v564
    %vm572 = vmor %vm570, %vm571
    %v573 = vsel %vm572, %v564, %v569
    %v574 = vrsqrt.pop %v548
    %v575 = vmul.f32 %v574, %v548
    %v576 = vmul.f32 %v575, %v574
    %v577 = vmul.f32 0.5, %v576
    %v578 = vsub.f32 1.5, %v577
    %v579 = vmul.f32 %v574, %v578
    %vm580 = vweird.f32 %v548
    %vm581 = vweird.f32 %v574
    %vm582 = vmor %vm580, %vm581
    %v583 = vsel %vm582, %v574, %v579
    %v584 = vrsqrt.pop %v549
    %v585 = vmul.f32 %v584, %v549
    %v586 = vmul.f32 %v585, %v584
    %v587 = vmul.f32 0.5, %v586
    %v588 = vsub.f32 1.5, %v587
    %v589 = vmul.f32 %v584, %v588
    %vm590 = vweird.f32 %v549
    %vm591 = vweird.f32 %v584
    %vm592 = vmor %vm590, %vm591
    %v593 = vsel %vm592, %v584, %v589
    %v594 = vrsqrt.pop %v550
    %v595 = vmul.f32 %v594, %v550
    %v596 = vmul.f32 %v595, %v594
    %v597 = vmul.f32 0.5, %v596
    %v598 = vsub.f32 1.5, %v597
    %v599 = vmul.f32 %v594, %v598
    %vm600 = vweird.f32 %v550
    %vm601 = vweird.f32 %v594
    %vm602 = vmor %vm600, %vm601
    %v603 = vsel %vm602, %v594, %v599
    %v604 = vrsqrt.pop %v551
    %v605 = vmul.f32 %v604, %v551
    %v606 = vmul.f32 %v605, %v604
    %v607 = vmul.f32 0.5, %v606
    %v608 = vsub.f32 1.5, %v607
    %v609 = vmul.f32 %v604, %v608
    %vm610 = vweird.f32 %v551
    %vm611 = vweird.f32 %v604
    %vm612 = vmor %vm610, %vm611
    %v613 = vsel %vm612, %v604, %v609
    %v614 = vrsqrt.pop %v552
    %v615 = vmul.f32 %v614, %v552
    %v616 = vmul.f32 %v615, %v614
    %v617 = vmul.f32 0.5, %v616
    %v618 = vsub.f32 1.5, %v617
    %v619 = vmul.f32 %v614, %v618
    %vm620 = vweird.f32 %v552
    %vm621 = vweird.f32 %v614
    %vm622 = vmor %vm620, %vm621
    %v623 = vsel %vm622, %v614, %v619
    %v624 = vrsqrt.pop %v553
    %v625 = vmul.f32 %v624, %v553
    %v626 = vmul.f32 %v625, %v624
    %v627 = vmul.f32 0.5, %v626
    %v628 = vsub.f32 1.5, %v627
    %v629 = vmul.f32 %v624, %v628
    %vm630 = vweird.f32 %v553
    %vm631 = vweird.f32 %v624
    %vm632 = vmor %vm630, %vm631
    %v633 = vsel %vm632, %v624, %v629
    %v634 = vmul.f32 %v498, %v563
    %v635 = vmul.f32 %v499, %v573
    %v636 = vmul.f32 %v500, %v583
    %v637 = vmul.f32 %v501, %v593
    %v638 = vmul.f32 %v502, %v603
    %v639 = vmul.f32 %v503, %v613
    %v640 = vmul.f32 %v504, %v623
    %v641 = vmul.f32 %v505, %v633
    %v643 = vperm.slane %v464, 0
    %v645 = vmul.f32 %v634, %v643
    %v646 = vmul.f32 %v635, %v643
    %v647 = vmul.f32 %v636, %v643
    %v648 = vmul.f32 %v637, %v643
    %v649 = vmul.f32 %v638, %v643
    %v650 = vmul.f32 %v639, %v643
    %v651 = vmul.f32 %v640, %v643
    %v652 = vmul.f32 %v641, %v643
    %v654 = vperm.slane %v465, 0
    %v656 = vadd.f32 %v645, %v654
    %v657 = vadd.f32 %v646, %v654
    %v658 = vadd.f32 %v647, %v654
    %v659 = vadd.f32 %v648, %v654
    %v660 = vadd.f32 %v649, %v654
    %v661 = vadd.f32 %v650, %v654
    %v662 = vadd.f32 %v651, %v654
    %v663 = vadd.f32 %v652, %v654
    %v664 = vld [vmem:[%s8] sm:$0xff]
    %v665 = vld [vmem:[%s8 + $0x8] sm:$0xff]
    %v666 = vld [vmem:[%s8 + $0x10] sm:$0xff]
    %v667 = vld [vmem:[%s8 + $0x18] sm:$0xff]
    %v668 = vld [vmem:[%s10] sm:$0xff]
    %v669 = vld [vmem:[%s10 + $0x8] sm:$0xff]
    %v670 = vld [vmem:[%s10 + $0x10] sm:$0xff]
    %v671 = vld [vmem:[%s10 + $0x18] sm:$0xff]
    %v672 = vld [vmem:[%s10 + $0x20] sm:$0xff]
    %v673 = vld [vmem:[%s10 + $0x28] sm:$0xff]
    %v674 = vld [vmem:[%s10 + $0x30] sm:$0xff]
    %v675 = vld [vmem:[%s10 + $0x38] sm:$0xff]
    %v676 = vld [vmem:[%s10 + $0x40] sm:$0xff]
    %v677 = vld [vmem:[%s10 + $0x48] sm:$0xff]
    %v678 = vld [vmem:[%s10 + $0x50] sm:$0xff]
    %v679 = vld [vmem:[%s10 + $0x58] sm:$0xff]
    %v680 = vld [vmem:[%s10 + $0x60] sm:$0xff]
    %v681 = vld [vmem:[%s10 + $0x68] sm:$0xff]
    %v682 = vld [vmem:[%s10 + $0x70] sm:$0xff]
    %v683 = vld [vmem:[%s10 + $0x78] sm:$0xff]
    %v684 = vld [vmem:[%s9] sm:$0x1]
    %v686 = vperm.slane %v684, 0
    %696 = vst [vmem:[#allocation1] ss:$4 sm:$0xff] %v656
    %s697 = scalar_lea.vmem [#allocation1], 1
    %698 = vst [vmem:[%s697] ss:$4 sm:$0xff] %v657
    %s699 = scalar_lea.vmem [#allocation1], 2
    %700 = vst [vmem:[%s699] ss:$4 sm:$0xff] %v658
    %s701 = scalar_lea.vmem [#allocation1], 3
    %702 = vst [vmem:[%s701] ss:$4 sm:$0xff] %v659
    %s703 = scalar_lea.vmem [#allocation1], 32
    %704 = vst [vmem:[%s703] ss:$4 sm:$0xff] %v660
    %s705 = scalar_lea.vmem [#allocation1], 33
    %706 = vst [vmem:[%s705] ss:$4 sm:$0xff] %v661
    %s707 = scalar_lea.vmem [#allocation1], 34
    %708 = vst [vmem:[%s707] ss:$4 sm:$0xff] %v662
    %s709 = scalar_lea.vmem [#allocation1], 35
    %710 = vst [vmem:[%s709] ss:$4 sm:$0xff] %v663
    %v711 = vld.sshfl [vmem:[#allocation1] sm:$0xff pattern:$0x73625140]
    %v712 = vld.sshfl [vmem:[#allocation1 + $0x20] sm:$0xff pattern:$0x73625140]
    %v713 = vsel %vm298, %v711, 0
    %v715 = vsel %vm298, %v712, 0
    %717 = vmatpush.msra.mxu0 0.0
    %718 = vmatpush.msra.mxu0 0.0
    %719 = vmatpush.msra.mxu0 0.0
    %720 = vmatpush.msra.mxu0 0.0
    %721 = vmatpush.msra.mxu0 0.0
    %722 = vmatpush.msra.mxu0 0.0
    %723 = vmatpush.msra.mxu0 0.0
    %724 = vmatpush.msra.mxu0 0.0
    %725 = vmatpush.msra.mxu0 0.0
    %726 = vmatpush.msra.mxu0 0.0
    %727 = vmatpush.msra.mxu0 0.0
    %728 = vmatpush.msra.mxu0 0.0
    %729 = vmatpush.msra.mxu0 %v667
    %730 = vmatpush.msra.mxu0 %v666
    %731 = vmatpush.msra.mxu0 %v665
    %732 = vmatpush.msra.mxu0 %v664
    %733 = vmatmul.f32.gmra.mxu0 %v713
    %v734 = vpop.f32.mrf.mxu0
    %v735 = vadd.f32 %v686, %v734
    %736 = vmatmul.f32.gmra.mxu0 %v715
    %v737 = vpop.f32.mrf.mxu0
    %v738 = vadd.f32 %v686, %v737
    %739 = vdwg.mxu0
    %v740 = vmax.f32 %v735, 0.0
    %v741 = vmax.f32 %v738, 0.0
    %v742 = vld [vmem:[%s11] sm:$0x1]
    %v744 = vperm.slane %v742, 0
    %746 = vmatpush.msra.mxu0 %v683
    %747 = vmatpush.msra.mxu0 %v682
    %748 = vmatpush.msra.mxu0 %v681
    %749 = vmatpush.msra.mxu0 %v680
    %750 = vmatpush.msra.mxu0 %v679
    %751 = vmatpush.msra.mxu0 %v678
    %752 = vmatpush.msra.mxu0 %v677
    %753 = vmatpush.msra.mxu0 %v676
    %754 = vmatpush.msra.mxu0 %v675
    %755 = vmatpush.msra.mxu0 %v674
    %756 = vmatpush.msra.mxu0 %v673
    %757 = vmatpush.msra.mxu0 %v672
    %758 = vmatpush.msra.mxu0 %v671
    %759 = vmatpush.msra.mxu0 %v670
    %760 = vmatpush.msra.mxu0 %v669
    %761 = vmatpush.msra.mxu0 %v668
    %762 = vmatmul.f32.gmra.mxu0 %v740
    %v763 = vpop.f32.mrf.mxu0
    %v764 = vadd.f32 %v744, %v763
    %765 = vmatmul.f32.gmra.mxu0 %v741
    %v766 = vpop.f32.mrf.mxu0
    %v767 = vadd.f32 %v744, %v766
    %768 = vdwg.mxu0
    %v771 = vrot.slane %v764, 2
    %v772 = vrot.slane %v764, 4
    %v773 = vrot.slane %v764, 6
    %v774 = vrot.slane %v767, 2
    %v775 = vrot.slane %v767, 4
    %v776 = vrot.slane %v767, 6
    %v783 = vadd.f32 %v456, %v764
    %v784 = vadd.f32 %v457, %v771
    %v785 = vadd.f32 %v458, %v772
    %v786 = vadd.f32 %v459, %v773
    %v787 = vadd.f32 %v460, %v767
    %v788 = vadd.f32 %v461, %v774
    %v789 = vadd.f32 %v462, %v775
    %v790 = vadd.f32 %v463, %v776
    %791 = vst.msk [vmem:[#allocation5] sm:$0x3] %vm59, %v783
    %792 = vst.msk [vmem:[#allocation5 + $0x2] sm:$0x3] %vm59, %v784
    %793 = vst.msk [vmem:[#allocation5 + $0x4] sm:$0x3] %vm59, %v785
    %794 = vst.msk [vmem:[#allocation5 + $0x6] sm:$0x3] %vm59, %v786
    %795 = vst.msk [vmem:[#allocation5 + $0x8] sm:$0x3] %vm59, %v787
    %796 = vst.msk [vmem:[#allocation5 + $0xa] sm:$0x3] %vm59, %v788
    %797 = vst.msk [vmem:[#allocation5 + $0xc] sm:$0x3] %vm59, %v789
    %798 = vst.msk [vmem:[#allocation5 + $0xe] sm:$0x3] %vm59, %v790
    // Predicated region
    $region61: #{tpu_custom_call.1} parent=1 // pred_check
      _
    $region62: #{tpu_custom_call.1} parent=1 // pred_check_branch
      %800 = sbr.rel (0) target = $region64
    $region63: #{tpu_custom_call.1} parent=1 // pred_region
      %802 = vsyncadd [#allocation6], 0
      %s803 = sshll.u32 [#allocation5], 4
      %s804 = int_to_ptr.vmem [resolvable:$true] %s803
      %s805 = sshll.u32 %s12, 4
      %s806 = int_to_ptr.hbm [resolvable:$true] %s805
      %811 = dma.vmem_to_hbm [thread:$0]  %s804, 256, %s806, [#allocation6], 32, 32, 2
    $region64: #{tpu_custom_call.1} parent=1 // pred_fallthru
      _
    // Predicated region
    $region65: #{tpu_custom_call.1} parent=1 // pred_check
      _
    $region66: #{tpu_custom_call.1} parent=1 // pred_check_branch
      %813 = sbr.rel (0) target = $region68
    $region67: #{tpu_custom_call.1} parent=1 // pred_region
      %815 = dma.done [#allocation6], 256
    $region68: #{tpu_custom_call.1} parent=1 // pred_fallthru
      _
    %816 = vsyncpa [#allocation6], 1

</llo_original>
